<compile_context>
chip_gen: v7x
topology: tpu7x:2x2x1
jax: 0.10.0
libtpu: 0.0.40
codegen_flags: <defaults>
</compile_context>

<pallas_src>
import jax
import jax.numpy as jnp
from jax.experimental import pallas as pl
from jax.experimental.pallas import tpu as pltpu


def _whole_copy_kernel(x_ref, o_ref, sem):
    # Single HBM->HBM DMA of the entire array.
    cp = pltpu.make_async_copy(x_ref, o_ref, sem)
    cp.start()
    cp.wait()


def _make_chunked_copy_kernel(num_chunks: int, chunk_rows: int):
    # num_chunks equal HBM->HBM DMAs along the leading axis; all started
    # before any wait so the DMA engines overlap.
    def kernel(x_ref, o_ref, sem):
        for i in range(num_chunks):
            pltpu.make_async_copy(
                x_ref.at[pl.ds(i * chunk_rows, chunk_rows)],
                o_ref.at[pl.ds(i * chunk_rows, chunk_rows)],
                sem.at[i],
            ).start()
        for i in range(num_chunks):
            pltpu.make_async_copy(
                x_ref.at[pl.ds(i * chunk_rows, chunk_rows)],
                o_ref.at[pl.ds(i * chunk_rows, chunk_rows)],
                sem.at[i],
            ).wait()

    return kernel


def _num_chunks(x: jax.Array) -> int:
    # Chunk only when the copy is big enough for the extra DMAs to matter and
    # the leading axis divides evenly (keeps every chunk identical).
    if x.ndim == 0 or x.nbytes < (4 << 20):
        return 1
    lead = x.shape[0]
    for c in (4, 3, 2):
        if lead % c == 0 and lead >= c:
            return c
    return 1


def saver_block_forward(x: jax.Array) -> jax.Array:
    """Identity forward of SaverBlock, routed through a Pallas TPU kernel.

    x: (N, C, H, W) array (NCHW, matching the PyTorch module).
    returns: array identical to x (same shape, dtype, values).
    """
    cost = pl.CostEstimate(flops=0, transcendentals=0, bytes_accessed=2 * x.nbytes)

    nchunks = _num_chunks(x)
    if nchunks == 1:
        kernel = _whole_copy_kernel
        sem_shape = ()
    else:
        chunk_rows = x.shape[0] // nchunks
        kernel = _make_chunked_copy_kernel(nchunks, chunk_rows)
        sem_shape = (nchunks,)

    return pl.pallas_call(
        kernel,
        out_shape=jax.ShapeDtypeStruct(x.shape, x.dtype),
        in_specs=[pl.BlockSpec(memory_space=pl.ANY)],
        out_specs=pl.BlockSpec(memory_space=pl.ANY),
        scratch_shapes=[pltpu.SemaphoreType.DMA(sem_shape)],
        cost_estimate=cost,
    )(x)


if __name__ == "__main__":
    key = jax.random.PRNGKey(0)

    # Small NCHW input consistent with the module's expected feature maps.
    x = jax.random.normal(key, (2, 4, 16, 16), dtype=jnp.float32)
    y = jax.block_until_ready(saver_block_forward(x))
    assert y.shape == x.shape and y.dtype == x.dtype
    assert bool(jnp.all(y == x))

    # Larger tensor (4 MiB) to exercise the chunked multi-DMA path.
    x_big = jax.random.normal(key, (4, 64, 64, 64), dtype=jnp.float32)
    y_big = jax.block_until_ready(saver_block_forward(x_big))
    assert y_big.shape == x_big.shape and y_big.dtype == x_big.dtype
    assert bool(jnp.all(y_big == x_big))

    print("KERNEL_OK")
</pallas_src>

<mosaic_0001>
module attributes {stable_mosaic.version = 11 : i64} {
  func.func @_whole_copy_kernel(%arg0: memref<2x4x16x16xf32, #tpu.memory_space<any>>, %arg1: memref<2x4x16x16xf32, #tpu.memory_space<any>>, %arg2: memref<!tpu.dma_semaphore, #tpu.memory_space<semaphore_mem>>) attributes {dimension_semantics = [], scalar_prefetch = 0 : i64, scratch_operands = 1 : i64, tpu.core_type = #tpu.core_type<tc>} {
    tpu.enqueue_dma source(%arg0 : memref<2x4x16x16xf32, #tpu.memory_space<any>>) target(%arg1 : memref<2x4x16x16xf32, #tpu.memory_space<any>>) target_semaphore(%arg2 : memref<!tpu.dma_semaphore, #tpu.memory_space<semaphore_mem>>)
    tpu.wait_dma2 semaphore(%arg2 : memref<!tpu.dma_semaphore, #tpu.memory_space<semaphore_mem>>) src(%arg0 : memref<2x4x16x16xf32, #tpu.memory_space<any>>) dst(%arg1 : memref<2x4x16x16xf32, #tpu.memory_space<any>>)
    return
  }
}

</mosaic_0001>

<llo_original>
// kernel: tpu_custom_call.1
$region0: #{tpu_custom_call.1}
  #allocation0 [shape = 'u32[]', space=smem, size = 0x4, offset = 0x4, fixed_abs, tag = 'smem constant byte address 0x4 - core index']
  #allocation1 [shape = 'u32[144,128]{1,0:T(1,128)}', space=vmem, size = 0x12000, scoped, tag = 'internal scratch']
  #allocation2 [shape = 's32[1]{0}', space=sflag, size = 0x4, scoped, tag = 'scratch operand']
  #allocation3 [shape = 's32[]', space=sflag, size = 0x4, offset = 0, fixed_abs, tag = 'sflag constant byte address 0x0 - dummy sync flag']
  #allocation4 [shape = 'u32[0]{0}', space=smem, size = 0, offset = 0, fixed_abs, tag = 'smem constant byte address 0x0 - null']
  %s0 = inlined_call_operand.hbm [shape: f32[2,4,16,16], index: 0, kind: input, shape index: {}]
  %s1 = inlined_call_operand.hbm [shape: f32[2,4,16,16], index: 1, kind: output, shape index: {}]
  %s2 = sld [smem:[#allocation0]]
  $region2: #{tpu_custom_call.1} parent=0
    _
  %s4 = ssub.s32 1, %s2
  %s5 = scalar_select 0, %s4, %s2
  %s7 = sshll.u32 1, 14
  %s8 = sxor.u32 4294967295, %s7
  %s11 = sshll.u32 3, 24
  %s12 = sxor.u32 4294967295, %s11
  %s13 = sand.u32 0, %s12
  %s15 = sor.u32 %s13, 0
  %18 = dma.general %s0, 2048, %s1, [#allocation2], [#allocation3], [#allocation4], %s15, 0
  %s19 = smul.u32 2, 4
  %s20 = smul.u32 %s19, 16
  %s21 = smul.u32 %s20, 1
  %s22 = sshll.u32 %s21, 4
  %23 = dma.done [#allocation2], %s22
  %24 = vsyncmov [#allocation2]
  %s25 = vpop.sfrf %24
  %p26 = scmp.eq.s32.totalorder %s25, 0
  %p27 = pneg %p26
  %29 = shalt.err (%p27)

</llo_original>
